<compile_context>
chip_gen: v5e
topology: v5e:2x2
jax: 0.10.0
libtpu: 0.0.40
codegen_flags: <defaults>
</compile_context>

<pallas_src>
import functools

import jax
import jax.numpy as jnp
from jax import lax
from jax.experimental import pallas as pl
from jax.experimental.pallas import tpu as pltpu

LEAKY_SLOPE = 0.01      # torch.nn.functional.leaky_relu default negative_slope
_LANE = 128             # TPU lane width
_SUBLANE = 8            # TPU sublane width


def _round_up(v, m):
    return (v + m - 1) // m * m


def _cdiv(a, b):
    return (a + b - 1) // b


def _vmem_capacity_bytes(default=64 * 1024 * 1024):
    """Per-core VMEM capacity; conservative 64 MiB default if the query fails."""
    try:
        info = pltpu.get_tpu_info()
        cap = getattr(info, "vmem_capacity_bytes", None)
        if cap:
            return int(cap)
    except Exception:
        pass
    return default


def _leaky_relu(h):
    return jnp.where(h > 0, h, LEAKY_SLOPE * h)


def _folded_kernel(x_ref, w1_ref, b1_ref, w2_ref, b2_ref, o_ref, *, feat, mxu_dtype):
    """Action is packed into x's pad lanes [feat:feat+A); w1/w2 carry the folded action rows."""
    x = x_ref[...]                              # (tm, F_pad) stored dtype (incl. packed action)
    x_f32 = x.astype(jnp.float32)

    h = jnp.dot(x.astype(mxu_dtype), w1_ref[...], preferred_element_type=jnp.float32)
    h = _leaky_relu(h + b1_ref[...])

    # Linear2's input is cat([h, action]): lanes >= feat come straight from x
    # (which holds [action, 0...] there) instead of h.
    col = lax.broadcasted_iota(jnp.int32, h.shape, 1)
    h2 = jnp.where(col < feat, h, x_f32)

    out = jnp.dot(h2.astype(mxu_dtype), w2_ref[...], preferred_element_type=jnp.float32)
    out = out + b2_ref[...] + x_f32             # bias + residual in f32
    o_ref[...] = out[:, :feat].astype(o_ref.dtype)


def _split_kernel(x_ref, a_ref, w1x_ref, w1a_ref, b1_ref, w2h_ref, w2a_ref, b2_ref,
                  o_ref, *, mxu_dtype):
    """F is already lane-dense; the action uses its own tiny MXU dot per linear."""
    x = x_ref[...]
    x_f32 = x.astype(jnp.float32)
    a_mx = a_ref[...].astype(mxu_dtype)

    h = jnp.dot(x.astype(mxu_dtype), w1x_ref[...], preferred_element_type=jnp.float32)
    h = h + jnp.dot(a_mx, w1a_ref[...], preferred_element_type=jnp.float32) + b1_ref[...]
    h = _leaky_relu(h)

    out = jnp.dot(h.astype(mxu_dtype), w2h_ref[...], preferred_element_type=jnp.float32)
    out = out + jnp.dot(a_mx, w2a_ref[...], preferred_element_type=jnp.float32) + b2_ref[...]
    out = out + x_f32
    o_ref[...] = out.astype(o_ref.dtype)


def resblock_forward(x, action, params, *, block_rows=512, mxu_dtype=jnp.bfloat16):
    """x: (T, B, F), action: (T, B, A) -> (T, B, F)."""
    T, B, F = x.shape
    A = action.shape[-1]
    N = T * B
    w1x, w1a, b1, w2h, w2a, b2 = params

    F_pad = _round_up(F, _LANE)
    fold = (F_pad != F) and (F_pad - F >= A)

    # ---- balanced row tiling, no row padding, >= 2 grid steps when possible --------
    if N <= _SUBLANE:
        tm = N
    else:
        n_tiles = max(2, _cdiv(N, block_rows))            # >= 2 for the 2-TC split
        tm = _round_up(_cdiv(N, n_tiles), _SUBLANE)
        if F_pad >= 512:                                   # keep v7x 64 MiB/TC comfortable
            tm = min(tm, 256)
        tm = max(tm, _SUBLANE)
    grid = (_cdiv(N, tm),)

    x2d = x.reshape(N, F)
    a2d = action.reshape(N, A)
    b1f = b1.reshape(1, F).astype(jnp.float32)
    b2f = b2.reshape(1, F).astype(jnp.float32)

    if fold:
        # Pack [x | action | 0] into one lane-dense operand; fold the action rows of
        # the weights into the padded (F_pad, F_pad) matrices.  The pad columns are
        # transferred anyway, so the action rides along at zero extra HBM cost.
        tail = F_pad - F - A
        parts = [x2d, a2d.astype(x2d.dtype)]
        if tail:
            parts.append(jnp.zeros((N, tail), x2d.dtype))
        x_in = jnp.concatenate(parts, axis=1)

        def fold_w(w_main, w_act):
            w = jnp.concatenate([w_main, w_act], axis=0)               # (F + A, F)
            return jnp.pad(w, ((0, tail), (0, F_pad - F))).astype(mxu_dtype)

        w1 = fold_w(w1x, w1a)
        w2 = fold_w(w2h, w2a)
        b1p = jnp.pad(b1f, ((0, 0), (0, F_pad - F)))
        b2p = jnp.pad(b2f, ((0, 0), (0, F_pad - F)))

        kernel = functools.partial(_folded_kernel, feat=F, mxu_dtype=mxu_dtype)
        operands = (x_in, w1, b1p, w2, b2p)
        n_tiled = 1
        tiled_widths = (F_pad,)
    else:
        A_pad = _round_up(A, _SUBLANE)
        a_in = a2d if A_pad == A else jnp.pad(a2d, ((0, 0), (0, A_pad - A)))
        pad_a = ((0, A_pad - A), (0, 0))
        kernel = functools.partial(_split_kernel, mxu_dtype=mxu_dtype)
        operands = (x2d, a_in,
                    w1x.astype(mxu_dtype), jnp.pad(w1a, pad_a).astype(mxu_dtype), b1f,
                    w2h.astype(mxu_dtype), jnp.pad(w2a, pad_a).astype(mxu_dtype), b2f)
        n_tiled = 2
        tiled_widths = (F, A_pad)

    # ---- explicit VMEM budget: pipelined activation tiles + resident weights +
    # ---- live f32 temporaries; capped at 75% of this generation's VMEM capacity.
    itm = x.dtype.itemsize
    weight_bytes = sum(int(op.size) * op.dtype.itemsize for op in operands[n_tiled:])
    est = (2 * tm * sum(tiled_widths) * itm       # double-buffered input tiles
           + 2 * tm * F * itm                     # double-buffered output tile
           + 4 * tm * F_pad * 4                   # live f32 temporaries in the body
           + 2 * weight_bytes)                    # resident weights (worst case 2-buf)
    vmem_limit = int(min(0.75 * _vmem_capacity_bytes(),
                         max(24 * 1024 * 1024, int(1.25 * est))))

    def launch(single_buffer_weights):
        def const_spec(shape):
            if single_buffer_weights and hasattr(pl, "Buffered"):
                # Constant index_map => DMA'd once; single-buffer to halve weight VMEM.
                return pl.BlockSpec(shape, lambda i: (0, 0),
                                    pipeline_mode=pl.Buffered(1))
            return pl.BlockSpec(shape, lambda i: (0, 0))

        in_specs = ([pl.BlockSpec((tm, w), lambda i: (i, 0)) for w in tiled_widths]
                    + [const_spec(op.shape) for op in operands[n_tiled:]])
        return pl.pallas_call(
            kernel,
            out_shape=jax.ShapeDtypeStruct((N, F), x.dtype),
            grid=grid,
            in_specs=in_specs,
            out_specs=pl.BlockSpec((tm, F), lambda i: (i, 0)),
            compiler_params=pltpu.CompilerParams(
                dimension_semantics=("parallel",),   # megacore split of the row grid
                vmem_limit_bytes=vmem_limit),
        )(*operands)

    try:
        out2d = launch(single_buffer_weights=True)
    except Exception:
        # Fallback if this jax/Mosaic version rejects single-buffered BlockSpecs.
        out2d = launch(single_buffer_weights=False)

    return out2d.reshape(T, B, F)


def init_params(key, feature_size, action_size, dtype=jnp.float32):
    """Deterministic synthetic init (PyTorch Linear shapes: (out, in) + bias)."""
    in_dim = feature_size + action_size
    k1, k2, k3, k4 = jax.random.split(key, 4)
    bound = 1.0 / jnp.sqrt(in_dim)
    # nn.Linear weight is (out_features, in_features); we store the transpose (in, out)
    # and split rows into [x-part ; action-part].
    w1 = jax.random.uniform(k1, (in_dim, feature_size), dtype, -bound, bound)
    b1 = jax.random.uniform(k2, (1, feature_size), dtype, -bound, bound)
    w2 = jax.random.uniform(k3, (in_dim, feature_size), dtype, -bound, bound)
    b2 = jax.random.uniform(k4, (1, feature_size), dtype, -bound, bound)
    w1x, w1a = w1[:feature_size], w1[feature_size:]
    w2h, w2a = w2[:feature_size], w2[feature_size:]
    return (w1x, w1a, b1, w2h, w2a, b2)


def resblock_ref(x, action, params):
    """Pure-JAX reference matching the PyTorch forward exactly."""
    w1x, w1a, b1, w2h, w2a, b2 = params
    w1 = jnp.concatenate([w1x, w1a], axis=0)
    w2 = jnp.concatenate([w2h, w2a], axis=0)
    h = jnp.concatenate([x, action], axis=2) @ w1 + b1[0]
    h = jnp.where(h > 0, h, LEAKY_SLOPE * h)
    out = jnp.concatenate([h, action], axis=2) @ w2 + b2[0]
    return out + x


if __name__ == "__main__":
    key = jax.random.PRNGKey(0)

    # (T, B, feature_size, action_size)
    cases = [
        (3, 5, 32, 4),     # odd F: action folded into x's pad lanes; ragged last row tile
        (8, 128, 128, 6),  # lane-dense F: separate tiny action MXU dot; 2 full row tiles
    ]

    for (T, B, F, A) in cases:
        key, kx, ka, kp = jax.random.split(key, 4)
        x = jax.random.normal(kx, (T, B, F), jnp.float32)
        action = jax.random.normal(ka, (T, B, A), jnp.float32)
        params = init_params(kp, F, A)
        ref = resblock_ref(x, action, params)

        # f32 MXU path: matches the pure-JAX reference up to accumulation order.
        out_f32 = jax.block_until_ready(
            resblock_forward(x, action, params, mxu_dtype=jnp.float32))
        assert out_f32.shape == (T, B, F)
        assert jnp.allclose(out_f32, ref, atol=1e-4, rtol=1e-4), \
            f"f32 mismatch vs reference for case {(T, B, F, A)}"

        # bf16 MXU path (production default): f32 accumulation, looser tolerance.
        out_bf16 = jax.block_until_ready(resblock_forward(x, action, params))
        assert out_bf16.shape == (T, B, F)
        assert jnp.allclose(out_bf16, ref, atol=5e-2, rtol=5e-2), \
            f"bf16 mismatch vs reference for case {(T, B, F, A)}"

    print("KERNEL_OK")
</pallas_src>

<mosaic_0001>
module attributes {stable_mosaic.version = 11 : i64} {
  func.func @_folded_kernel(%arg0: i32, %arg1: memref<8x128xf32, #tpu.memory_space<vmem>>, %arg2: memref<128x128xf32, #tpu.memory_space<vmem>>, %arg3: memref<1x128xf32, #tpu.memory_space<vmem>>, %arg4: memref<128x128xf32, #tpu.memory_space<vmem>>, %arg5: memref<1x128xf32, #tpu.memory_space<vmem>>, %arg6: memref<8x32xf32, #tpu.memory_space<vmem>>) attributes {dimension_semantics = [#tpu.dimension_semantics<parallel>], iteration_bounds = array<i64: 2>, scalar_prefetch = 0 : i64, scratch_operands = 0 : i64, tpu.core_type = #tpu.core_type<tc>, window_params = [{transform_indices = @transform_0, window_bounds = array<i64: 8, 128>}, {pipeline_mode = #tpu.pipeline_mode<synchronous>, transform_indices = @transform_1, window_bounds = array<i64: 128, 128>}, {pipeline_mode = #tpu.pipeline_mode<synchronous>, transform_indices = @transform_2, window_bounds = array<i64: 1, 128>}, {pipeline_mode = #tpu.pipeline_mode<synchronous>, transform_indices = @transform_3, window_bounds = array<i64: 128, 128>}, {pipeline_mode = #tpu.pipeline_mode<synchronous>, transform_indices = @transform_4, window_bounds = array<i64: 1, 128>}, {transform_indices = @transform_5, window_bounds = array<i64: 8, 32>}]} {
    %c0 = arith.constant 0 : index
    %c0_0 = arith.constant 0 : index
    %0 = vector.load %arg1[%c0, %c0_0] : memref<8x128xf32, #tpu.memory_space<vmem>>, vector<8x128xf32>
    %c0_1 = arith.constant 0 : index
    %c0_2 = arith.constant 0 : index
    %1 = vector.load %arg2[%c0_1, %c0_2] : memref<128x128xf32, #tpu.memory_space<vmem>>, vector<128x128xf32>
    %cst = arith.constant dense<0.000000e+00> : vector<8x128xf32>
    %2 = tpu.matmul %0, %1, %cst {dimension_numbers = #tpu.dot_dimension_numbers<[1], [0], [0], [1], [0, 0, 1, 1], [], []>} : vector<8x128xf32>, vector<128x128xf32>, vector<8x128xf32> -> vector<8x128xf32>
    %c0_3 = arith.constant 0 : index
    %c0_4 = arith.constant 0 : index
    %3 = vector.load %arg3[%c0_3, %c0_4] : memref<1x128xf32, #tpu.memory_space<vmem>>, vector<1x128xf32>
    %4 = vector.broadcast %3 : vector<1x128xf32> to vector<8x128xf32>
    %5 = arith.addf %2, %4 : vector<8x128xf32>
    %cst_5 = arith.constant 0.000000e+00 : f32
    %6 = vector.broadcast %cst_5 : f32 to vector<8x128xf32>
    %7 = arith.cmpf ogt, %5, %6 : vector<8x128xf32>
    %cst_6 = arith.constant 0.00999999977 : f32
    %8 = vector.broadcast %cst_6 : f32 to vector<8x128xf32>
    %9 = arith.mulf %8, %5 : vector<8x128xf32>
    %10 = arith.select %7, %5, %9 : vector<8x128xi1>, vector<8x128xf32>
    %11 = tpu.iota {dimensions = array<i32: 1>} : vector<8x128xi32>
    %c32_i32 = arith.constant 32 : i32
    %12 = vector.broadcast %c32_i32 : i32 to vector<8x128xi32>
    %13 = arith.cmpi slt, %11, %12 : vector<8x128xi32>
    %14 = arith.select %13, %10, %0 : vector<8x128xi1>, vector<8x128xf32>
    %c0_7 = arith.constant 0 : index
    %c0_8 = arith.constant 0 : index
    %15 = vector.load %arg4[%c0_7, %c0_8] : memref<128x128xf32, #tpu.memory_space<vmem>>, vector<128x128xf32>
    %cst_9 = arith.constant dense<0.000000e+00> : vector<8x128xf32>
    %16 = tpu.matmul %14, %15, %cst_9 {dimension_numbers = #tpu.dot_dimension_numbers<[1], [0], [0], [1], [0, 0, 1, 1], [], []>} : vector<8x128xf32>, vector<128x128xf32>, vector<8x128xf32> -> vector<8x128xf32>
    %c0_10 = arith.constant 0 : index
    %c0_11 = arith.constant 0 : index
    %17 = vector.load %arg5[%c0_10, %c0_11] : memref<1x128xf32, #tpu.memory_space<vmem>>, vector<1x128xf32>
    %18 = vector.broadcast %17 : vector<1x128xf32> to vector<8x128xf32>
    %19 = arith.addf %16, %18 : vector<8x128xf32>
    %20 = arith.addf %19, %0 : vector<8x128xf32>
    %21 = vector.extract_strided_slice %20 {offsets = [0, 0], sizes = [8, 32], strides = [1, 1]} : vector<8x128xf32> to vector<8x32xf32>
    %c0_12 = arith.constant 0 : index
    %c0_13 = arith.constant 0 : index
    %22 = vector.load %arg6[%c0_12, %c0_13] : memref<8x32xf32, #tpu.memory_space<vmem>>, vector<8x32xf32>
    tpu.vector_store %arg6[%c0_12, %c0_13], %21 {strides = array<i32>} : memref<8x32xf32, #tpu.memory_space<vmem>>, vector<8x32xf32>,
    return
  }
  func.func @transform_0(%arg0: i32) -> (i32, i32) {
    %c0_i32 = arith.constant 0 : i32
    %c0_i32_0 = arith.constant 0 : i32
    return %arg0, %c0_i32 : i32, i32
  }
  func.func @transform_1(%arg0: i32) -> (i32, i32) {
    %c0_i32 = arith.constant 0 : i32
    %c0_i32_0 = arith.constant 0 : i32
    %c0_i32_1 = arith.constant 0 : i32
    return %c0_i32, %c0_i32_0 : i32, i32
  }
  func.func @transform_2(%arg0: i32) -> (i32, i32) {
    %c0_i32 = arith.constant 0 : i32
    %c0_i32_0 = arith.constant 0 : i32
    %c0_i32_1 = arith.constant 0 : i32
    return %c0_i32, %c0_i32_0 : i32, i32
  }
  func.func @transform_3(%arg0: i32) -> (i32, i32) {
    %c0_i32 = arith.constant 0 : i32
    %c0_i32_0 = arith.constant 0 : i32
    %c0_i32_1 = arith.constant 0 : i32
    return %c0_i32, %c0_i32_0 : i32, i32
  }
  func.func @transform_4(%arg0: i32) -> (i32, i32) {
    %c0_i32 = arith.constant 0 : i32
    %c0_i32_0 = arith.constant 0 : i32
    %c0_i32_1 = arith.constant 0 : i32
    return %c0_i32, %c0_i32_0 : i32, i32
  }
  func.func @transform_5(%arg0: i32) -> (i32, i32) {
    %c0_i32 = arith.constant 0 : i32
    %c0_i32_0 = arith.constant 0 : i32
    return %arg0, %c0_i32 : i32, i32
  }
}

module attributes {stable_mosaic.version = 11 : i64} {
  func.func @_folded_kernel(%arg0: i32, %arg1: memref<8x128xf32, #tpu.memory_space<vmem>>, %arg2: memref<128x128xf32, #tpu.memory_space<vmem>>, %arg3: memref<1x128xf32, #tpu.memory_space<vmem>>, %arg4: memref<128x128xf32, #tpu.memory_space<vmem>>, %arg5: memref<1x128xf32, #tpu.memory_space<vmem>>, %arg6: memref<8x32xf32, #tpu.memory_space<vmem>>) attributes {dimension_semantics = [#tpu.dimension_semantics<parallel>], iteration_bounds = array<i64: 2>, scalar_prefetch = 0 : i64, scratch_operands = 0 : i64, tpu.core_type = #tpu.core_type<tc>, window_params = [{transform_indices = @transform_0, window_bounds = array<i64: 8, 128>}, {pipeline_mode = #tpu.pipeline_mode<synchronous>, transform_indices = @transform_1, window_bounds = array<i64: 128, 128>}, {pipeline_mode = #tpu.pipeline_mode<synchronous>, transform_indices = @transform_2, window_bounds = array<i64: 1, 128>}, {pipeline_mode = #tpu.pipeline_mode<synchronous>, transform_indices = @transform_3, window_bounds = array<i64: 128, 128>}, {pipeline_mode = #tpu.pipeline_mode<synchronous>, transform_indices = @transform_4, window_bounds = array<i64: 1, 128>}, {transform_indices = @transform_5, window_bounds = array<i64: 8, 32>}]} {
    %c0 = arith.constant 0 : index
    %c0_0 = arith.constant 0 : index
    %0 = vector.load %arg1[%c0, %c0_0] : memref<8x128xf32, #tpu.memory_space<vmem>>, vector<8x128xf32>
    %c0_1 = arith.constant 0 : index
    %c0_2 = arith.constant 0 : index
    %1 = vector.load %arg2[%c0_1, %c0_2] : memref<128x128xf32, #tpu.memory_space<vmem>>, vector<128x128xf32>
    %cst = arith.constant dense<0.000000e+00> : vector<8x128xf32>
    %2 = tpu.matmul %0, %1, %cst {dimension_numbers = #tpu.dot_dimension_numbers<[1], [0], [0], [1], [0, 0, 1, 1], [], []>} : vector<8x128xf32>, vector<128x128xf32>, vector<8x128xf32> -> vector<8x128xf32>
    %c0_3 = arith.constant 0 : index
    %c0_4 = arith.constant 0 : index
    %3 = vector.load %arg3[%c0_3, %c0_4] : memref<1x128xf32, #tpu.memory_space<vmem>>, vector<1x128xf32>
    %4 = vector.broadcast %3 : vector<1x128xf32> to vector<8x128xf32>
    %5 = arith.addf %2, %4 : vector<8x128xf32>
    %cst_5 = arith.constant 0.000000e+00 : f32
    %6 = vector.broadcast %cst_5 : f32 to vector<8x128xf32>
    %7 = arith.cmpf ogt, %5, %6 : vector<8x128xf32>
    %cst_6 = arith.constant 0.00999999977 : f32
    %8 = vector.broadcast %cst_6 : f32 to vector<8x128xf32>
    %9 = arith.mulf %8, %5 : vector<8x128xf32>
    %10 = arith.select %7, %5, %9 : vector<8x128xi1>, vector<8x128xf32>
    %11 = tpu.iota {dimensions = array<i32: 1>} : vector<8x128xi32>
    %c32_i32 = arith.constant 32 : i32
    %12 = vector.broadcast %c32_i32 : i32 to vector<8x128xi32>
    %13 = arith.cmpi slt, %11, %12 : vector<8x128xi32>
    %14 = arith.select %13, %10, %0 : vector<8x128xi1>, vector<8x128xf32>
    %c0_7 = arith.constant 0 : index
    %c0_8 = arith.constant 0 : index
    %15 = vector.load %arg4[%c0_7, %c0_8] : memref<128x128xf32, #tpu.memory_space<vmem>>, vector<128x128xf32>
    %cst_9 = arith.constant dense<0.000000e+00> : vector<8x128xf32>
    %16 = tpu.matmul %14, %15, %cst_9 {dimension_numbers = #tpu.dot_dimension_numbers<[1], [0], [0], [1], [0, 0, 1, 1], [], []>} : vector<8x128xf32>, vector<128x128xf32>, vector<8x128xf32> -> vector<8x128xf32>
    %c0_10 = arith.constant 0 : index
    %c0_11 = arith.constant 0 : index
    %17 = vector.load %arg5[%c0_10, %c0_11] : memref<1x128xf32, #tpu.memory_space<vmem>>, vector<1x128xf32>
    %18 = vector.broadcast %17 : vector<1x128xf32> to vector<8x128xf32>
    %19 = arith.addf %16, %18 : vector<8x128xf32>
    %20 = arith.addf %19, %0 : vector<8x128xf32>
    %21 = vector.extract_strided_slice %20 {offsets = [0, 0], sizes = [8, 32], strides = [1, 1]} : vector<8x128xf32> to vector<8x32xf32>
    %c0_12 = arith.constant 0 : index
    %c0_13 = arith.constant 0 : index
    %22 = vector.load %arg6[%c0_12, %c0_13] : memref<8x32xf32, #tpu.memory_space<vmem>>, vector<8x32xf32>
    tpu.vector_store %arg6[%c0_12, %c0_13], %21 {strides = array<i32>} : memref<8x32xf32, #tpu.memory_space<vmem>>, vector<8x32xf32>,
    return
  }
  func.func @transform_0(%arg0: i32) -> (i32, i32) {
    %c0_i32 = arith.constant 0 : i32
    %c0_i32_0 = arith.constant 0 : i32
    return %arg0, %c0_i32 : i32, i32
  }
  func.func @transform_1(%arg0: i32) -> (i32, i32) {
    %c0_i32 = arith.constant 0 : i32
    %c0_i32_0 = arith.constant 0 : i32
    %c0_i32_1 = arith.constant 0 : i32
    return %c0_i32, %c0_i32_0 : i32, i32
  }
  func.func @transform_2(%arg0: i32) -> (i32, i32) {
    %c0_i32 = arith.constant 0 : i32
    %c0_i32_0 = arith.constant 0 : i32
    %c0_i32_1 = arith.constant 0 : i32
    return %c0_i32, %c0_i32_0 : i32, i32
  }
  func.func @transform_3(%arg0: i32) -> (i32, i32) {
    %c0_i32 = arith.constant 0 : i32
    %c0_i32_0 = arith.constant 0 : i32
    %c0_i32_1 = arith.constant 0 : i32
    return %c0_i32, %c0_i32_0 : i32, i32
  }
  func.func @transform_4(%arg0: i32) -> (i32, i32) {
    %c0_i32 = arith.constant 0 : i32
    %c0_i32_0 = arith.constant 0 : i32
    %c0_i32_1 = arith.constant 0 : i32
    return %c0_i32, %c0_i32_0 : i32, i32
  }
  func.func @transform_5(%arg0: i32) -> (i32, i32) {
    %c0_i32 = arith.constant 0 : i32
    %c0_i32_0 = arith.constant 0 : i32
    return %arg0, %c0_i32 : i32, i32
  }
}

</mosaic_0001>

<llo_original>
// kernel: tpu_custom_call.1
$region0: #{tpu_custom_call.1}
  #allocation0 [shape = 'u32[]', space=smem, size = 0x4, offset = 0x4, fixed_abs, tag = 'smem constant byte address 0x4 - core index']
  #allocation1 [shape = 'u32[72,128]{1,0:T(1,128)}', space=vmem, size = 0x9000, scoped, tag = 'internal scratch']
  %s0 = inlined_call_operand.hbm [shape: f32[15,128], index: 0, kind: input, shape index: {}]
  %s1 = inlined_call_operand.hbm [shape: f32[128,128], index: 1, kind: input, shape index: {}]
  %s2 = inlined_call_operand.vmem [shape: f32[1,128], index: 2, kind: input, shape index: {}]
  %s3 = inlined_call_operand.hbm [shape: f32[128,128], index: 3, kind: input, shape index: {}]
  %s4 = inlined_call_operand.vmem [shape: f32[1,128], index: 4, kind: input, shape index: {}]
  %s5 = inlined_call_operand.hbm [shape: f32[15,32], index: 5, kind: output, shape index: {}]
  %s6 = sld [smem:[#allocation0]]
  $region65: #{tpu_custom_call.1} parent=0
    _
  %s8 = ssub.s32 1, %s6
  %s9 = scalar_select 0, %s8, %s6
  $region1: #{tpu_custom_call.1} parent=0
    #allocation2 [shape = 'u8[8192]{0}', space=vmem, size = 0x2000, scoped, tag = 'input window, operand 0']
    #allocation3 [shape = 's32[2]{0}', space=sflag, size = 0x8, scoped, tag = 'scoped memory for tpu_custom_call.1']
    #allocation4 [shape = 's32[2]{0}', space=sflag, size = 0x8, scoped, tag = 'scoped memory for tpu_custom_call.1']
    #allocation5 [shape = 'u8[65536]{0}', space=vmem, size = 0x10000, scoped, tag = 'input window, operand 1, single buffered']
    #allocation6 [shape = 's32[1]{0}', space=sflag, size = 0x4, scoped, tag = 'scoped memory for tpu_custom_call.1']
    #allocation7 [shape = 'u8[65536]{0}', space=vmem, size = 0x10000, scoped, tag = 'input window, operand 3, single buffered']
    #allocation8 [shape = 'u8[8192]{0}', space=vmem, size = 0x2000, scoped, tag = 'output window, operand 0']
    %10 = vsyncpa [#allocation3], 0
    %s11 = scalar_lea.sflag [#allocation3], 1
    %12 = vsyncpa %s11, 0
    %13 = vsyncpa [#allocation6], 0
    %14 = vsyncpa [#allocation4], 0
    %s15 = scalar_lea.sflag [#allocation4], 1
    %16 = vsyncpa %s15, 0
    loop: start=0, step=1, limit=4
    $region2: #{tpu_custom_call.1} parent=1 // loop_pre_header
      _
    $region3: #{tpu_custom_call.1} parent=1 // loop_header
      %s18 = sphi 0, %s22
      %p19 = scmp.ge.s32.totalorder %s18, 4
      %s28 = sphi 0, %s30
      %s31 = sphi 0, %s28
      %s32 = sphi 0, %s31
      %s48 = sphi 0, %s32
      %s52 = sphi 0, %s52
      %s54 = sphi 0, %s52
      %s55 = sphi 0, %s54
      %s69 = sphi 0, %s55
      %s73 = sphi 0, %s73
      %s75 = sphi 0, %s73
      %s76 = sphi 0, %s75
      %s90 = sphi 0, %s76
      %s94 = sphi 0, %s94
      %s96 = sphi 0, %s94
      %s97 = sphi 0, %s96
      %s111 = sphi 0, %s97
      %s115 = sphi 0, %s115
      %s117 = sphi 0, %s115
      %s118 = sphi 0, %s117
      %s132 = sphi 0, %s118
      %s138 = sphi 0, %s140
      %s141 = sphi 0, %s138
      %s142 = sphi 0, %s141
      %s158 = sphi 0, %s142
    $region4: #{tpu_custom_call.1} parent=1 // loop_header_branch
      %21 = sbr.rel (%p19) target = $region8
    $region5: #{tpu_custom_call.1} parent=1 // loop_body
      %s23 = ssub.s32 %s18, 1
      %s24 = ssub.s32 %s18, 2
      %s25 = sadd.s32 %s18, 1
      %s26 = ssub.s32 %s18, %s25
      %p27 = scmp.eq.s32.totalorder %s26, 0
      %s29 = sadd.s32 %s28, 1
      %s30 = scalar_select %p27, %s28, %s29
      %p33 = pneg %p27
      %p34 = scmp.eq.s32.totalorder %s18, 1
      %p35 = por %p33, %p34
      %p36 = scmp.ne.s32.totalorder %s28, %s31
      %p37 = scmp.eq.s32.totalorder %s18, 0
      %p38 = por %p36, %p37
      %p39 = scmp.ne.s32.totalorder %s28, %s31
      %p40 = scmp.eq.s32.totalorder %s23, 1
      %p41 = por %p39, %p40
      %p42 = scmp.ne.s32.totalorder %s31, %s32
      %p43 = scmp.eq.s32.totalorder %s23, 0
      %p44 = por %p42, %p43
      %p45 = scmp.ne.s32.totalorder %s31, %s32
      %p46 = scmp.eq.s32.totalorder %s24, 1
      %p47 = por %p45, %p46
      %p49 = scmp.ne.s32.totalorder %s32, %s48
      %p50 = scmp.eq.s32.totalorder %s24, 0
      %p51 = por %p49, %p50
      %s53 = sadd.s32 %s52, 1
      %p56 = scmp.eq.s32.totalorder %s18, 1
      %p57 = scmp.ne.s32.totalorder %s52, %s54
      %p58 = scmp.eq.s32.totalorder %s18, 0
      %p59 = por %p57, %p58
      %p60 = scmp.ne.s32.totalorder %s52, %s54
      %p61 = scmp.eq.s32.totalorder %s23, 1
      %p62 = por %p60, %p61
      %p63 = scmp.ne.s32.totalorder %s54, %s55
      %p64 = scmp.eq.s32.totalorder %s23, 0
      %p65 = por %p63, %p64
      %p66 = scmp.ne.s32.totalorder %s54, %s55
      %p67 = scmp.eq.s32.totalorder %s24, 1
      %p68 = por %p66, %p67
      %p70 = scmp.ne.s32.totalorder %s55, %s69
      %p71 = scmp.eq.s32.totalorder %s24, 0
      %p72 = por %p70, %p71
      %s74 = sadd.s32 %s73, 1
      %p77 = scmp.eq.s32.totalorder %s18, 1
      %p78 = scmp.ne.s32.totalorder %s73, %s75
      %p79 = scmp.eq.s32.totalorder %s18, 0
      %p80 = por %p78, %p79
      %p81 = scmp.ne.s32.totalorder %s73, %s75
      %p82 = scmp.eq.s32.totalorder %s23, 1
      %p83 = por %p81, %p82
      %p84 = scmp.ne.s32.totalorder %s75, %s76
      %p85 = scmp.eq.s32.totalorder %s23, 0
      %p86 = por %p84, %p85
      %p87 = scmp.ne.s32.totalorder %s75, %s76
      %p88 = scmp.eq.s32.totalorder %s24, 1
      %p89 = por %p87, %p88
      %p91 = scmp.ne.s32.totalorder %s76, %s90
      %p92 = scmp.eq.s32.totalorder %s24, 0
      %p93 = por %p91, %p92
      %s95 = sadd.s32 %s94, 1
      %p98 = scmp.eq.s32.totalorder %s18, 1
      %p99 = scmp.ne.s32.totalorder %s94, %s96
      %p100 = scmp.eq.s32.totalorder %s18, 0
      %p101 = por %p99, %p100
      %p102 = scmp.ne.s32.totalorder %s94, %s96
      %p103 = scmp.eq.s32.totalorder %s23, 1
      %p104 = por %p102, %p103
      %p105 = scmp.ne.s32.totalorder %s96, %s97
      %p106 = scmp.eq.s32.totalorder %s23, 0
      %p107 = por %p105, %p106
      %p108 = scmp.ne.s32.totalorder %s96, %s97
      %p109 = scmp.eq.s32.totalorder %s24, 1
      %p110 = por %p108, %p109
      %p112 = scmp.ne.s32.totalorder %s97, %s111
      %p113 = scmp.eq.s32.totalorder %s24, 0
      %p114 = por %p112, %p113
      %s116 = sadd.s32 %s115, 1
      %p119 = scmp.eq.s32.totalorder %s18, 1
      %p120 = scmp.ne.s32.totalorder %s115, %s117
      %p121 = scmp.eq.s32.totalorder %s18, 0
      %p122 = por %p120, %p121
      %p123 = scmp.ne.s32.totalorder %s115, %s117
      %p124 = scmp.eq.s32.totalorder %s23, 1
      %p125 = por %p123, %p124
      %p126 = scmp.ne.s32.totalorder %s117, %s118
      %p127 = scmp.eq.s32.totalorder %s23, 0
      %p128 = por %p126, %p127
      %p129 = scmp.ne.s32.totalorder %s117, %s118
      %p130 = scmp.eq.s32.totalorder %s24, 1
      %p131 = por %p129, %p130
      %p133 = scmp.ne.s32.totalorder %s118, %s132
      %p134 = scmp.eq.s32.totalorder %s24, 0
      %p135 = por %p133, %p134
      %s136 = ssub.s32 %s18, %s25
      %p137 = scmp.eq.s32.totalorder %s136, 0
      %s139 = sadd.s32 %s138, 1
      %s140 = scalar_select %p137, %s138, %s139
      %p143 = pneg %p137
      %p144 = scmp.eq.s32.totalorder %s18, 1
      %p145 = por %p143, %p144
      %p146 = scmp.ne.s32.totalorder %s138, %s141
      %p147 = scmp.eq.s32.totalorder %s18, 0
      %p148 = por %p146, %p147
      %p149 = scmp.ne.s32.totalorder %s138, %s141
      %p150 = scmp.eq.s32.totalorder %s23, 1
      %p151 = por %p149, %p150
      %p152 = scmp.ne.s32.totalorder %s141, %s142
      %p153 = scmp.eq.s32.totalorder %s23, 0
      %p154 = por %p152, %p153
      %p155 = scmp.ne.s32.totalorder %s141, %s142
      %p156 = scmp.eq.s32.totalorder %s24, 1
      %p157 = por %p155, %p156
      %p159 = scmp.ne.s32.totalorder %s142, %s158
      %p160 = scmp.eq.s32.totalorder %s24, 0
      %p161 = por %p159, %p160
      %p162 = scmp.le.s32.totalorder 1, %s18
      %p163 = scmp.lt.s32.totalorder %s18, 3
      %p164 = pnand %p162, %p163
      %p165 = pneg %p164
      // Predicated region
      $region9: #{tpu_custom_call.1} parent=5 // pred_check
        _
      $region10: #{tpu_custom_call.1} parent=5 // pred_check_branch
        %167 = sbr.rel (%p164) target = $region12
      $region11: #{tpu_custom_call.1} parent=5 // pred_region
        %s168 = ssub.s32 %s18, 1
        // Predicated region
        $region13: #{tpu_custom_call.1} parent=11 // pred_check
          %p169 = pneg %p65
        $region14: #{tpu_custom_call.1} parent=11 // pred_check_branch
          %171 = sbr.rel (%p169) target = $region16
        $region15: #{tpu_custom_call.1} parent=11 // pred_region
          %173 = vsyncadd [#allocation6], 0
          %s174 = sshll.u32 %s1, 4
          %s175 = int_to_ptr.hbm [resolvable:$true] %s174
          %s176 = sshll.u32 [#allocation5], 4
          %s177 = int_to_ptr.vmem [resolvable:$true] %s176
          %182 = dma.hbm_to_vmem [thread:$0]  %s175, 2048, %s177, [#allocation6], 128, 128, 8
        $region16: #{tpu_custom_call.1} parent=11 // pred_fallthru
          _
        // Predicated region
        $region17: #{tpu_custom_call.1} parent=11 // pred_check
          %p183 = pneg %p86
        $region18: #{tpu_custom_call.1} parent=11 // pred_check_branch
          %185 = sbr.rel (%p183) target = $region20
        $region19: #{tpu_custom_call.1} parent=11 // pred_region
          _
        $region20: #{tpu_custom_call.1} parent=11 // pred_fallthru
          _
        // Predicated region
        $region21: #{tpu_custom_call.1} parent=11 // pred_check
          %p186 = pneg %p107
        $region22: #{tpu_custom_call.1} parent=11 // pred_check_branch
          %188 = sbr.rel (%p186) target = $region24
        $region23: #{tpu_custom_call.1} parent=11 // pred_region
          %190 = vsyncadd [#allocation6], 0
          %s191 = sshll.u32 %s3, 4
          %s192 = int_to_ptr.hbm [resolvable:$true] %s191
          %s193 = sshll.u32 [#allocation7], 4
          %s194 = int_to_ptr.vmem [resolvable:$true] %s193
          %199 = dma.hbm_to_vmem [thread:$0]  %s192, 2048, %s194, [#allocation6], 128, 128, 8
        $region24: #{tpu_custom_call.1} parent=11 // pred_fallthru
          _
        // Predicated region
        $region25: #{tpu_custom_call.1} parent=11 // pred_check
          %p200 = pneg %p128
        $region26: #{tpu_custom_call.1} parent=11 // pred_check_branch
          %202 = sbr.rel (%p200) target = $region28
        $region27: #{tpu_custom_call.1} parent=11 // pred_region
          _
        $region28: #{tpu_custom_call.1} parent=11 // pred_fallthru
          _
      $region12: #{tpu_custom_call.1} parent=5 // pred_fallthru
        _
      %p203 = scmp.lt.s32.totalorder %s18, 2
      // Predicated region
      $region29: #{tpu_custom_call.1} parent=5 // pred_check
        %p204 = pneg %p203
      $region30: #{tpu_custom_call.1} parent=5 // pred_check_branch
        %206 = sbr.rel (%p204) target = $region32
      $region31: #{tpu_custom_call.1} parent=5 // pred_region
        // Predicated region
        $region33: #{tpu_custom_call.1} parent=31 // pred_check
          %p207 = pneg %p38
        $region34: #{tpu_custom_call.1} parent=31 // pred_check_branch
          %209 = sbr.rel (%p207) target = $region36
        $region35: #{tpu_custom_call.1} parent=31 // pred_region
          %s210 = sand.u32 %s28, 1
          %s211 = scalar_lea.sflag [#allocation3], %s210
          %s212 = sand.u32 %s28, 1
          %s213 = smul.addr %s212, 8
          %s214 = scalar_lea.vmem [#allocation2], %s213
          %216 = vsyncadd %s211, 0
          %s217 = smul.addr %s18, 8
          %s218 = scalar_lea.hbm %s0, %s217
          %s220 = sshll.u32 %s218, 4
          %s221 = int_to_ptr.hbm [resolvable:$true] %s220
          %s222 = sshll.u32 %s214, 4
          %s223 = int_to_ptr.vmem [resolvable:$true] %s222
          %225 = dma.hbm_to_vmem [thread:$0]  %s221, 128, %s223, %s211
        $region36: #{tpu_custom_call.1} parent=31 // pred_fallthru
          _
      $region32: #{tpu_custom_call.1} parent=5 // pred_fallthru
        _
      %p226 = scmp.le.s32.totalorder 1, %s18
      %p227 = scmp.lt.s32.totalorder %s18, 3
      %p228 = pnand %p226, %p227
      %p229 = pneg %p228
      // Predicated region
      $region37: #{tpu_custom_call.1} parent=5 // pred_check
        _
      $region38: #{tpu_custom_call.1} parent=5 // pred_check_branch
        %231 = sbr.rel (%p228) target = $region40
      $region39: #{tpu_custom_call.1} parent=5 // pred_region
        %s232 = ssub.s32 %s18, 1
        %s233 = sand.u32 %s31, 1
        %s234 = scalar_lea.sflag [#allocation3], %s233
        %s235 = sand.u32 %s31, 1
        %s236 = smul.addr %s235, 8
        %s237 = scalar_lea.vmem [#allocation2], %s236
        // Predicated region
        $region41: #{tpu_custom_call.1} parent=39 // pred_check
          %p238 = pneg %p44
        $region42: #{tpu_custom_call.1} parent=39 // pred_check_branch
          %240 = sbr.rel (%p238) target = $region44
        $region43: #{tpu_custom_call.1} parent=39 // pred_region
          %242 = dma.done %s234, 128
        $region44: #{tpu_custom_call.1} parent=39 // pred_fallthru
          _
        // Predicated region
        $region45: #{tpu_custom_call.1} parent=39 // pred_check
          %p243 = pneg %p65
        $region46: #{tpu_custom_call.1} parent=39 // pred_check_branch
          %245 = sbr.rel (%p243) target = $region48
        $region47: #{tpu_custom_call.1} parent=39 // pred_region
          %247 = dma.done [#allocation6], 2048
        $region48: #{tpu_custom_call.1} parent=39 // pred_fallthru
          _
        // Predicated region
        $region49: #{tpu_custom_call.1} parent=39 // pred_check
          %p248 = pneg %p107
        $region50: #{tpu_custom_call.1} parent=39 // pred_check_branch
          %250 = sbr.rel (%p248) target = $region52
        $region51: #{tpu_custom_call.1} parent=39 // pred_region
          %252 = dma.done [#allocation6], 2048
        $region52: #{tpu_custom_call.1} parent=39 // pred_fallthru
          _
        %s253 = sand.u32 %s31, 1
        %s254 = scalar_lea.sflag [#allocation3], %s253
        %s255 = sand.u32 %s31, 1
        %s256 = smul.addr %s255, 8
        %s257 = scalar_lea.vmem [#allocation2], %s256
        %p258 = pneg %p44
        %p259 = pneg %p41
        %p260 = pneg %p65
        %p261 = pneg %p62
        %p262 = pneg %p86
        %p263 = pneg %p83
        %p264 = pneg %p107
        %p265 = pneg %p104
        %p266 = pneg %p128
        %p267 = pneg %p125
        %p268 = pneg %p154
        %p269 = pneg %p151
        %s270 = sand.u32 %s141, 1
        %s271 = scalar_lea.sflag [#allocation4], %s270
        %s272 = sand.u32 %s141, 1
        %s273 = smul.addr %s272, 8
        %s274 = scalar_lea.vmem [#allocation8], %s273
        %v275 = vld [vmem:[%s237] sm:$0xff]
        %v276 = vld [vmem:[#allocation5] sm:$0xff]
        %v277 = vld [vmem:[#allocation5 + $0x8] sm:$0xff]
        %v278 = vld [vmem:[#allocation5 + $0x10] sm:$0xff]
        %v279 = vld [vmem:[#allocation5 + $0x18] sm:$0xff]
        %v280 = vld [vmem:[#allocation5 + $0x20] sm:$0xff]
        %v281 = vld [vmem:[#allocation5 + $0x28] sm:$0xff]
        %v282 = vld [vmem:[#allocation5 + $0x30] sm:$0xff]
        %v283 = vld [vmem:[#allocation5 + $0x38] sm:$0xff]
        %v284 = vld [vmem:[#allocation5 + $0x40] sm:$0xff]
        %v285 = vld [vmem:[#allocation5 + $0x48] sm:$0xff]
        %v286 = vld [vmem:[#allocation5 + $0x50] sm:$0xff]
        %v287 = vld [vmem:[#allocation5 + $0x58] sm:$0xff]
        %v288 = vld [vmem:[#allocation5 + $0x60] sm:$0xff]
        %v289 = vld [vmem:[#allocation5 + $0x68] sm:$0xff]
        %v290 = vld [vmem:[#allocation5 + $0x70] sm:$0xff]
        %v291 = vld [vmem:[#allocation5 + $0x78] sm:$0xff]
        %v292 = vld [vmem:[%s2] sm:$0x1]
        %v294 = vperm.slane %v292, 0
        %296 = vmatpush.msra.mxu0 %v291
        %297 = vmatpush.msra.mxu0 %v290
        %298 = vmatpush.msra.mxu0 %v289
        %299 = vmatpush.msra.mxu0 %v288
        %300 = vmatpush.msra.mxu0 %v287
        %301 = vmatpush.msra.mxu0 %v286
        %302 = vmatpush.msra.mxu0 %v285
        %303 = vmatpush.msra.mxu0 %v284
        %304 = vmatpush.msra.mxu0 %v283
        %305 = vmatpush.msra.mxu0 %v282
        %306 = vmatpush.msra.mxu0 %v281
        %307 = vmatpush.msra.mxu0 %v280
        %308 = vmatpush.msra.mxu0 %v279
        %309 = vmatpush.msra.mxu0 %v278
        %310 = vmatpush.msra.mxu0 %v277
        %311 = vmatpush.msra.mxu0 %v276
        %312 = vmatmul.f32.gmra.mxu0 %v275
        %v313 = vpop.f32.mrf.mxu0
        %v314 = vadd.f32 %v294, %v313
        %315 = vdwg.mxu0
        %vm316 = vcmp.gt.f32.partialorder %v314, 0.0
        %v317 = vmul.f32 %v314, 0.01
        %v318 = vsel %vm316, %v314, %v317
        %v319 = vlaneseq
        %v320 = vand.u32 %v319, 127
        %vm321 = vcmp.lt.s32.totalorder %v320, 32
        %v322 = vsel %vm321, %v318, %v275
        %v323 = vld [vmem:[#allocation7] sm:$0xff]
        %v324 = vld [vmem:[#allocation7 + $0x8] sm:$0xff]
        %v325 = vld [vmem:[#allocation7 + $0x10] sm:$0xff]
        %v326 = vld [vmem:[#allocation7 + $0x18] sm:$0xff]
        %v327 = vld [vmem:[#allocation7 + $0x20] sm:$0xff]
        %v328 = vld [vmem:[#allocation7 + $0x28] sm:$0xff]
        %v329 = vld [vmem:[#allocation7 + $0x30] sm:$0xff]
        %v330 = vld [vmem:[#allocation7 + $0x38] sm:$0xff]
        %v331 = vld [vmem:[#allocation7 + $0x40] sm:$0xff]
        %v332 = vld [vmem:[#allocation7 + $0x48] sm:$0xff]
        %v333 = vld [vmem:[#allocation7 + $0x50] sm:$0xff]
        %v334 = vld [vmem:[#allocation7 + $0x58] sm:$0xff]
        %v335 = vld [vmem:[#allocation7 + $0x60] sm:$0xff]
        %v336 = vld [vmem:[#allocation7 + $0x68] sm:$0xff]
        %v337 = vld [vmem:[#allocation7 + $0x70] sm:$0xff]
        %v338 = vld [vmem:[#allocation7 + $0x78] sm:$0xff]
        %v339 = vld [vmem:[%s4] sm:$0x1]
        %v341 = vperm.slane %v339, 0
        %343 = vmatpush.msra.mxu0 %v338
        %344 = vmatpush.msra.mxu0 %v337
        %345 = vmatpush.msra.mxu0 %v336
        %346 = vmatpush.msra.mxu0 %v335
        %347 = vmatpush.msra.mxu0 %v334
        %348 = vmatpush.msra.mxu0 %v333
        %349 = vmatpush.msra.mxu0 %v332
        %350 = vmatpush.msra.mxu0 %v331
        %351 = vmatpush.msra.mxu0 %v330
        %352 = vmatpush.msra.mxu0 %v329
        %353 = vmatpush.msra.mxu0 %v328
        %354 = vmatpush.msra.mxu0 %v327
        %355 = vmatpush.msra.mxu0 %v326
        %356 = vmatpush.msra.mxu0 %v325
        %357 = vmatpush.msra.mxu0 %v324
        %358 = vmatpush.msra.mxu0 %v323
        %359 = vmatmul.f32.gmra.mxu0 %v322
        %v360 = vpop.f32.mrf.mxu0
        %v361 = vadd.f32 %v341, %v360
        %362 = vdwg.mxu0
        %v363 = vadd.f32 %v361, %v275
        %vm364 = vcmask 261120
        %365 = vst.msk [vmem:[%s274] sm:$0xff] %vm364, %v363
        %s366 = sand.u32 %s141, 1
        %s367 = scalar_lea.sflag [#allocation4], %s366
        %s368 = sand.u32 %s141, 1
        %s369 = smul.addr %s368, 8
        %s370 = scalar_lea.vmem [#allocation8], %s369
        // Predicated region
        $region53: #{tpu_custom_call.1} parent=39 // pred_check
          %p371 = pneg %p151
        $region54: #{tpu_custom_call.1} parent=39 // pred_check_branch
          %373 = sbr.rel (%p371) target = $region56
        $region55: #{tpu_custom_call.1} parent=39 // pred_region
          %375 = vsyncadd %s367, 0
          %s376 = smul.addr %s23, 8
          %s377 = scalar_lea.hbm %s5, %s376
          %s379 = sshll.u32 %s370, 4
          %s380 = int_to_ptr.vmem [resolvable:$true] %s379
          %s381 = sshll.u32 %s377, 4
          %s382 = int_to_ptr.hbm [resolvable:$true] %s381
          %384 = dma.vmem_to_hbm [thread:$0]  %s380, 128, %s382, %s367
        $region56: #{tpu_custom_call.1} parent=39 // pred_fallthru
          _
      $region40: #{tpu_custom_call.1} parent=5 // pred_fallthru
        _
      %p385 = scmp.le.s32.totalorder 2, %s18
      // Predicated region
      $region57: #{tpu_custom_call.1} parent=5 // pred_check
        %p386 = pneg %p385
      $region58: #{tpu_custom_call.1} parent=5 // pred_check_branch
        %388 = sbr.rel (%p386) target = $region60
      $region59: #{tpu_custom_call.1} parent=5 // pred_region
        %s389 = ssub.s32 %s18, 2
        // Predicated region
        $region61: #{tpu_custom_call.1} parent=59 // pred_check
          %p390 = pneg %p157
        $region62: #{tpu_custom_call.1} parent=59 // pred_check_branch
          %392 = sbr.rel (%p390) target = $region64
        $region63: #{tpu_custom_call.1} parent=59 // pred_region
          %s393 = sand.u32 %s142, 1
          %s394 = scalar_lea.sflag [#allocation4], %s393
          %s395 = sand.u32 %s142, 1
          %s396 = smul.addr %s395, 8
          %s397 = scalar_lea.vmem [#allocation8], %s396
          %399 = dma.done %s394, 128
        $region64: #{tpu_custom_call.1} parent=59 // pred_fallthru
          _
      $region60: #{tpu_custom_call.1} parent=5 // pred_fallthru
        _
    $region6: #{tpu_custom_call.1} parent=1 // loop_footer
      %s22 = sadd.s32 1, %s18
    $region7: #{tpu_custom_call.1} parent=1 // loop_footer_branch
      %17 = sbr.rel target = $region3
    $region8: #{tpu_custom_call.1} parent=1 // loop_exit
      _
    %400 = vsyncpa [#allocation3], 1
    %s401 = scalar_lea.sflag [#allocation3], 1
    %402 = vsyncpa %s401, 1
    %403 = vsyncpa [#allocation6], 1
    %404 = vsyncpa [#allocation4], 1
    %s405 = scalar_lea.sflag [#allocation4], 1
    %406 = vsyncpa %s405, 1

// kernel: tpu_custom_call.1
$region0: #{tpu_custom_call.1}
  #allocation0 [shape = 'u32[]', space=smem, size = 0x4, offset = 0x4, fixed_abs, tag = 'smem constant byte address 0x4 - core index']
  #allocation1 [shape = 'u32[72,128]{1,0:T(1,128)}', space=vmem, size = 0x9000, scoped, tag = 'internal scratch']
  %s0 = inlined_call_operand.hbm [shape: f32[15,128], index: 0, kind: input, shape index: {}]
  %s1 = inlined_call_operand.hbm [shape: f32[128,128], index: 1, kind: input, shape index: {}]
  %s2 = inlined_call_operand.vmem [shape: f32[1,128], index: 2, kind: input, shape index: {}]
  %s3 = inlined_call_operand.hbm [shape: f32[128,128], index: 3, kind: input, shape index: {}]
  %s4 = inlined_call_operand.vmem [shape: f32[1,128], index: 4, kind: input, shape index: {}]
  %s5 = inlined_call_operand.hbm [shape: f32[15,32], index: 5, kind: output, shape index: {}]
  %s6 = sld [smem:[#allocation0]]
  $region65: #{tpu_custom_call.1} parent=0
    _
  %s8 = ssub.s32 1, %s6
  %s9 = scalar_select 0, %s8, %s6
  $region1: #{tpu_custom_call.1} parent=0
    #allocation2 [shape = 'u8[8192]{0}', space=vmem, size = 0x2000, scoped, tag = 'input window, operand 0']
    #allocation3 [shape = 's32[2]{0}', space=sflag, size = 0x8, scoped, tag = 'scoped memory for tpu_custom_call.1']
    #allocation4 [shape = 's32[2]{0}', space=sflag, size = 0x8, scoped, tag = 'scoped memory for tpu_custom_call.1']
    #allocation5 [shape = 'u8[65536]{0}', space=vmem, size = 0x10000, scoped, tag = 'input window, operand 1, single buffered']
    #allocation6 [shape = 's32[1]{0}', space=sflag, size = 0x4, scoped, tag = 'scoped memory for tpu_custom_call.1']
    #allocation7 [shape = 'u8[65536]{0}', space=vmem, size = 0x10000, scoped, tag = 'input window, operand 3, single buffered']
    #allocation8 [shape = 'u8[8192]{0}', space=vmem, size = 0x2000, scoped, tag = 'output window, operand 0']
    %10 = vsyncpa [#allocation3], 0
    %s11 = scalar_lea.sflag [#allocation3], 1
    %12 = vsyncpa %s11, 0
    %13 = vsyncpa [#allocation6], 0
    %14 = vsyncpa [#allocation4], 0
    %s15 = scalar_lea.sflag [#allocation4], 1
    %16 = vsyncpa %s15, 0
    loop: start=0, step=1, limit=4
    $region2: #{tpu_custom_call.1} parent=1 // loop_pre_header
      _
    $region3: #{tpu_custom_call.1} parent=1 // loop_header
      %s18 = sphi 0, %s22
      %p19 = scmp.ge.s32.totalorder %s18, 4
      %s28 = sphi 0, %s30
      %s31 = sphi 0, %s28
      %s32 = sphi 0, %s31
      %s48 = sphi 0, %s32
      %s52 = sphi 0, %s52
      %s54 = sphi 0, %s52
      %s55 = sphi 0, %s54
      %s69 = sphi 0, %s55
      %s73 = sphi 0, %s73
      %s75 = sphi 0, %s73
      %s76 = sphi 0, %s75
      %s90 = sphi 0, %s76
      %s94 = sphi 0, %s94
      %s96 = sphi 0, %s94
      %s97 = sphi 0, %s96
      %s111 = sphi 0, %s97
      %s115 = sphi 0, %s115
      %s117 = sphi 0, %s115
      %s118 = sphi 0, %s117
      %s132 = sphi 0, %s118
      %s138 = sphi 0, %s140
      %s141 = sphi 0, %s138
      %s142 = sphi 0, %s141
      %s158 = sphi 0, %s142
    $region4: #{tpu_custom_call.1} parent=1 // loop_header_branch
      %21 = sbr.rel (%p19) target = $region8
    $region5: #{tpu_custom_call.1} parent=1 // loop_body
      %s23 = ssub.s32 %s18, 1
      %s24 = ssub.s32 %s18, 2
      %s25 = sadd.s32 %s18, 1
      %s26 = ssub.s32 %s18, %s25
      %p27 = scmp.eq.s32.totalorder %s26, 0
      %s29 = sadd.s32 %s28, 1
      %s30 = scalar_select %p27, %s28, %s29
      %p33 = pneg %p27
      %p34 = scmp.eq.s32.totalorder %s18, 1
      %p35 = por %p33, %p34
      %p36 = scmp.ne.s32.totalorder %s28, %s31
      %p37 = scmp.eq.s32.totalorder %s18, 0
      %p38 = por %p36, %p37
      %p39 = scmp.ne.s32.totalorder %s28, %s31
      %p40 = scmp.eq.s32.totalorder %s23, 1
      %p41 = por %p39, %p40
      %p42 = scmp.ne.s32.totalorder %s31, %s32
      %p43 = scmp.eq.s32.totalorder %s23, 0
      %p44 = por %p42, %p43
      %p45 = scmp.ne.s32.totalorder %s31, %s32
      %p46 = scmp.eq.s32.totalorder %s24, 1
      %p47 = por %p45, %p46
      %p49 = scmp.ne.s32.totalorder %s32, %s48
      %p50 = scmp.eq.s32.totalorder %s24, 0
      %p51 = por %p49, %p50
      %s53 = sadd.s32 %s52, 1
      %p56 = scmp.eq.s32.totalorder %s18, 1
      %p57 = scmp.ne.s32.totalorder %s52, %s54
      %p58 = scmp.eq.s32.totalorder %s18, 0
      %p59 = por %p57, %p58
      %p60 = scmp.ne.s32.totalorder %s52, %s54
      %p61 = scmp.eq.s32.totalorder %s23, 1
      %p62 = por %p60, %p61
      %p63 = scmp.ne.s32.totalorder %s54, %s55
      %p64 = scmp.eq.s32.totalorder %s23, 0
      %p65 = por %p63, %p64
      %p66 = scmp.ne.s32.totalorder %s54, %s55
      %p67 = scmp.eq.s32.totalorder %s24, 1
      %p68 = por %p66, %p67
      %p70 = scmp.ne.s32.totalorder %s55, %s69
      %p71 = scmp.eq.s32.totalorder %s24, 0
      %p72 = por %p70, %p71
      %s74 = sadd.s32 %s73, 1
      %p77 = scmp.eq.s32.totalorder %s18, 1
      %p78 = scmp.ne.s32.totalorder %s73, %s75
      %p79 = scmp.eq.s32.totalorder %s18, 0
      %p80 = por %p78, %p79
      %p81 = scmp.ne.s32.totalorder %s73, %s75
      %p82 = scmp.eq.s32.totalorder %s23, 1
      %p83 = por %p81, %p82
      %p84 = scmp.ne.s32.totalorder %s75, %s76
      %p85 = scmp.eq.s32.totalorder %s23, 0
      %p86 = por %p84, %p85
      %p87 = scmp.ne.s32.totalorder %s75, %s76
      %p88 = scmp.eq.s32.totalorder %s24, 1
      %p89 = por %p87, %p88
      %p91 = scmp.ne.s32.totalorder %s76, %s90
      %p92 = scmp.eq.s32.totalorder %s24, 0
      %p93 = por %p91, %p92
      %s95 = sadd.s32 %s94, 1
      %p98 = scmp.eq.s32.totalorder %s18, 1
      %p99 = scmp.ne.s32.totalorder %s94, %s96
      %p100 = scmp.eq.s32.totalorder %s18, 0
      %p101 = por %p99, %p100
      %p102 = scmp.ne.s32.totalorder %s94, %s96
      %p103 = scmp.eq.s32.totalorder %s23, 1
      %p104 = por %p102, %p103
      %p105 = scmp.ne.s32.totalorder %s96, %s97
      %p106 = scmp.eq.s32.totalorder %s23, 0
      %p107 = por %p105, %p106
      %p108 = scmp.ne.s32.totalorder %s96, %s97
      %p109 = scmp.eq.s32.totalorder %s24, 1
      %p110 = por %p108, %p109
      %p112 = scmp.ne.s32.totalorder %s97, %s111
      %p113 = scmp.eq.s32.totalorder %s24, 0
      %p114 = por %p112, %p113
      %s116 = sadd.s32 %s115, 1
      %p119 = scmp.eq.s32.totalorder %s18, 1
      %p120 = scmp.ne.s32.totalorder %s115, %s117
      %p121 = scmp.eq.s32.totalorder %s18, 0
      %p122 = por %p120, %p121
      %p123 = scmp.ne.s32.totalorder %s115, %s117
      %p124 = scmp.eq.s32.totalorder %s23, 1
      %p125 = por %p123, %p124
      %p126 = scmp.ne.s32.totalorder %s117, %s118
      %p127 = scmp.eq.s32.totalorder %s23, 0
      %p128 = por %p126, %p127
      %p129 = scmp.ne.s32.totalorder %s117, %s118
      %p130 = scmp.eq.s32.totalorder %s24, 1
      %p131 = por %p129, %p130
      %p133 = scmp.ne.s32.totalorder %s118, %s132
      %p134 = scmp.eq.s32.totalorder %s24, 0
      %p135 = por %p133, %p134
      %s136 = ssub.s32 %s18, %s25
      %p137 = scmp.eq.s32.totalorder %s136, 0
      %s139 = sadd.s32 %s138, 1
      %s140 = scalar_select %p137, %s138, %s139
      %p143 = pneg %p137
      %p144 = scmp.eq.s32.totalorder %s18, 1
      %p145 = por %p143, %p144
      %p146 = scmp.ne.s32.totalorder %s138, %s141
      %p147 = scmp.eq.s32.totalorder %s18, 0
      %p148 = por %p146, %p147
      %p149 = scmp.ne.s32.totalorder %s138, %s141
      %p150 = scmp.eq.s32.totalorder %s23, 1
      %p151 = por %p149, %p150
      %p152 = scmp.ne.s32.totalorder %s141, %s142
      %p153 = scmp.eq.s32.totalorder %s23, 0
      %p154 = por %p152, %p153
      %p155 = scmp.ne.s32.totalorder %s141, %s142
      %p156 = scmp.eq.s32.totalorder %s24, 1
      %p157 = por %p155, %p156
      %p159 = scmp.ne.s32.totalorder %s142, %s158
      %p160 = scmp.eq.s32.totalorder %s24, 0
      %p161 = por %p159, %p160
      %p162 = scmp.le.s32.totalorder 1, %s18
      %p163 = scmp.lt.s32.totalorder %s18, 3
      %p164 = pnand %p162, %p163
      %p165 = pneg %p164
      // Predicated region
      $region9: #{tpu_custom_call.1} parent=5 // pred_check
        _
      $region10: #{tpu_custom_call.1} parent=5 // pred_check_branch
        %167 = sbr.rel (%p164) target = $region12
      $region11: #{tpu_custom_call.1} parent=5 // pred_region
        %s168 = ssub.s32 %s18, 1
        // Predicated region
        $region13: #{tpu_custom_call.1} parent=11 // pred_check
          %p169 = pneg %p65
        $region14: #{tpu_custom_call.1} parent=11 // pred_check_branch
          %171 = sbr.rel (%p169) target = $region16
        $region15: #{tpu_custom_call.1} parent=11 // pred_region
          %173 = vsyncadd [#allocation6], 0
          %s174 = sshll.u32 %s1, 4
          %s175 = int_to_ptr.hbm [resolvable:$true] %s174
          %s176 = sshll.u32 [#allocation5], 4
          %s177 = int_to_ptr.vmem [resolvable:$true] %s176
          %182 = dma.hbm_to_vmem [thread:$0]  %s175, 2048, %s177, [#allocation6], 128, 128, 8
        $region16: #{tpu_custom_call.1} parent=11 // pred_fallthru
          _
        // Predicated region
        $region17: #{tpu_custom_call.1} parent=11 // pred_check
          %p183 = pneg %p86
        $region18: #{tpu_custom_call.1} parent=11 // pred_check_branch
          %185 = sbr.rel (%p183) target = $region20
        $region19: #{tpu_custom_call.1} parent=11 // pred_region
          _
        $region20: #{tpu_custom_call.1} parent=11 // pred_fallthru
          _
        // Predicated region
        $region21: #{tpu_custom_call.1} parent=11 // pred_check
          %p186 = pneg %p107
        $region22: #{tpu_custom_call.1} parent=11 // pred_check_branch
          %188 = sbr.rel (%p186) target = $region24
        $region23: #{tpu_custom_call.1} parent=11 // pred_region
          %190 = vsyncadd [#allocation6], 0
          %s191 = sshll.u32 %s3, 4
          %s192 = int_to_ptr.hbm [resolvable:$true] %s191
          %s193 = sshll.u32 [#allocation7], 4
          %s194 = int_to_ptr.vmem [resolvable:$true] %s193
          %199 = dma.hbm_to_vmem [thread:$0]  %s192, 2048, %s194, [#allocation6], 128, 128, 8
        $region24: #{tpu_custom_call.1} parent=11 // pred_fallthru
          _
        // Predicated region
        $region25: #{tpu_custom_call.1} parent=11 // pred_check
          %p200 = pneg %p128
        $region26: #{tpu_custom_call.1} parent=11 // pred_check_branch
          %202 = sbr.rel (%p200) target = $region28
        $region27: #{tpu_custom_call.1} parent=11 // pred_region
          _
        $region28: #{tpu_custom_call.1} parent=11 // pred_fallthru
          _
      $region12: #{tpu_custom_call.1} parent=5 // pred_fallthru
        _
      %p203 = scmp.lt.s32.totalorder %s18, 2
      // Predicated region
      $region29: #{tpu_custom_call.1} parent=5 // pred_check
        %p204 = pneg %p203
      $region30: #{tpu_custom_call.1} parent=5 // pred_check_branch
        %206 = sbr.rel (%p204) target = $region32
      $region31: #{tpu_custom_call.1} parent=5 // pred_region
        // Predicated region
        $region33: #{tpu_custom_call.1} parent=31 // pred_check
          %p207 = pneg %p38
        $region34: #{tpu_custom_call.1} parent=31 // pred_check_branch
          %209 = sbr.rel (%p207) target = $region36
        $region35: #{tpu_custom_call.1} parent=31 // pred_region
          %s210 = sand.u32 %s28, 1
          %s211 = scalar_lea.sflag [#allocation3], %s210
          %s212 = sand.u32 %s28, 1
          %s213 = smul.addr %s212, 8
          %s214 = scalar_lea.vmem [#allocation2], %s213
          %216 = vsyncadd %s211, 0
          %s217 = smul.addr %s18, 8
          %s218 = scalar_lea.hbm %s0, %s217
          %s220 = sshll.u32 %s218, 4
          %s221 = int_to_ptr.hbm [resolvable:$true] %s220
          %s222 = sshll.u32 %s214, 4
          %s223 = int_to_ptr.vmem [resolvable:$true] %s222
          %225 = dma.hbm_to_vmem [thread:$0]  %s221, 128, %s223, %s211
        $region36: #{tpu_custom_call.1} parent=31 // pred_fallthru
          _
      $region32: #{tpu_custom_call.1} parent=5 // pred_fallthru
        _
      %p226 = scmp.le.s32.totalorder 1, %s18
      %p227 = scmp.lt.s32.totalorder %s18, 3
      %p228 = pnand %p226, %p227
      %p229 = pneg %p228
      // Predicated region
      $region37: #{tpu_custom_call.1} parent=5 // pred_check
        _
      $region38: #{tpu_custom_call.1} parent=5 // pred_check_branch
        %231 = sbr.rel (%p228) target = $region40
      $region39: #{tpu_custom_call.1} parent=5 // pred_region
        %s232 = ssub.s32 %s18, 1
        %s233 = sand.u32 %s31, 1
        %s234 = scalar_lea.sflag [#allocation3], %s233
        %s235 = sand.u32 %s31, 1
        %s236 = smul.addr %s235, 8
        %s237 = scalar_lea.vmem [#allocation2], %s236
        // Predicated region
        $region41: #{tpu_custom_call.1} parent=39 // pred_check
          %p238 = pneg %p44
        $region42: #{tpu_custom_call.1} parent=39 // pred_check_branch
          %240 = sbr.rel (%p238) target = $region44
        $region43: #{tpu_custom_call.1} parent=39 // pred_region
          %242 = dma.done %s234, 128
        $region44: #{tpu_custom_call.1} parent=39 // pred_fallthru
          _
        // Predicated region
        $region45: #{tpu_custom_call.1} parent=39 // pred_check
          %p243 = pneg %p65
        $region46: #{tpu_custom_call.1} parent=39 // pred_check_branch
          %245 = sbr.rel (%p243) target = $region48
        $region47: #{tpu_custom_call.1} parent=39 // pred_region
          %247 = dma.done [#allocation6], 2048
        $region48: #{tpu_custom_call.1} parent=39 // pred_fallthru
          _
        // Predicated region
        $region49: #{tpu_custom_call.1} parent=39 // pred_check
          %p248 = pneg %p107
        $region50: #{tpu_custom_call.1} parent=39 // pred_check_branch
          %250 = sbr.rel (%p248) target = $region52
        $region51: #{tpu_custom_call.1} parent=39 // pred_region
          %252 = dma.done [#allocation6], 2048
        $region52: #{tpu_custom_call.1} parent=39 // pred_fallthru
          _
        %s253 = sand.u32 %s31, 1
        %s254 = scalar_lea.sflag [#allocation3], %s253
        %s255 = sand.u32 %s31, 1
        %s256 = smul.addr %s255, 8
        %s257 = scalar_lea.vmem [#allocation2], %s256
        %p258 = pneg %p44
        %p259 = pneg %p41
        %p260 = pneg %p65
        %p261 = pneg %p62
        %p262 = pneg %p86
        %p263 = pneg %p83
        %p264 = pneg %p107
        %p265 = pneg %p104
        %p266 = pneg %p128
        %p267 = pneg %p125
        %p268 = pneg %p154
        %p269 = pneg %p151
        %s270 = sand.u32 %s141, 1
        %s271 = scalar_lea.sflag [#allocation4], %s270
        %s272 = sand.u32 %s141, 1
        %s273 = smul.addr %s272, 8
        %s274 = scalar_lea.vmem [#allocation8], %s273
        %v275 = vld [vmem:[%s237] sm:$0xff]
        %v276 = vld [vmem:[#allocation5] sm:$0xff]
        %v277 = vld [vmem:[#allocation5 + $0x8] sm:$0xff]
        %v278 = vld [vmem:[#allocation5 + $0x10] sm:$0xff]
        %v279 = vld [vmem:[#allocation5 + $0x18] sm:$0xff]
        %v280 = vld [vmem:[#allocation5 + $0x20] sm:$0xff]
        %v281 = vld [vmem:[#allocation5 + $0x28] sm:$0xff]
        %v282 = vld [vmem:[#allocation5 + $0x30] sm:$0xff]
        %v283 = vld [vmem:[#allocation5 + $0x38] sm:$0xff]
        %v284 = vld [vmem:[#allocation5 + $0x40] sm:$0xff]
        %v285 = vld [vmem:[#allocation5 + $0x48] sm:$0xff]
        %v286 = vld [vmem:[#allocation5 + $0x50] sm:$0xff]
        %v287 = vld [vmem:[#allocation5 + $0x58] sm:$0xff]
        %v288 = vld [vmem:[#allocation5 + $0x60] sm:$0xff]
        %v289 = vld [vmem:[#allocation5 + $0x68] sm:$0xff]
        %v290 = vld [vmem:[#allocation5 + $0x70] sm:$0xff]
        %v291 = vld [vmem:[#allocation5 + $0x78] sm:$0xff]
        %v292 = vld [vmem:[%s2] sm:$0x1]
        %v294 = vperm.slane %v292, 0
        %296 = vmatpush.msra.mxu0 %v291
        %297 = vmatpush.msra.mxu0 %v290
        %298 = vmatpush.msra.mxu0 %v289
        %299 = vmatpush.msra.mxu0 %v288
        %300 = vmatpush.msra.mxu0 %v287
        %301 = vmatpush.msra.mxu0 %v286
        %302 = vmatpush.msra.mxu0 %v285
        %303 = vmatpush.msra.mxu0 %v284
        %304 = vmatpush.msra.mxu0 %v283
        %305 = vmatpush.msra.mxu0 %v282
        %306 = vmatpush.msra.mxu0 %v281
        %307 = vmatpush.msra.mxu0 %v280
        %308 = vmatpush.msra.mxu0 %v279
        %309 = vmatpush.msra.mxu0 %v278
        %310 = vmatpush.msra.mxu0 %v277
        %311 = vmatpush.msra.mxu0 %v276
        %312 = vmatmul.f32.gmra.mxu0 %v275
        %v313 = vpop.f32.mrf.mxu0
        %v314 = vadd.f32 %v294, %v313
        %315 = vdwg.mxu0
        %vm316 = vcmp.gt.f32.partialorder %v314, 0.0
        %v317 = vmul.f32 %v314, 0.01
        %v318 = vsel %vm316, %v314, %v317
        %v319 = vlaneseq
        %v320 = vand.u32 %v319, 127
        %vm321 = vcmp.lt.s32.totalorder %v320, 32
        %v322 = vsel %vm321, %v318, %v275
        %v323 = vld [vmem:[#allocation7] sm:$0xff]
        %v324 = vld [vmem:[#allocation7 + $0x8] sm:$0xff]
        %v325 = vld [vmem:[#allocation7 + $0x10] sm:$0xff]
        %v326 = vld [vmem:[#allocation7 + $0x18] sm:$0xff]
        %v327 = vld [vmem:[#allocation7 + $0x20] sm:$0xff]
        %v328 = vld [vmem:[#allocation7 + $0x28] sm:$0xff]
        %v329 = vld [vmem:[#allocation7 + $0x30] sm:$0xff]
        %v330 = vld [vmem:[#allocation7 + $0x38] sm:$0xff]
        %v331 = vld [vmem:[#allocation7 + $0x40] sm:$0xff]
        %v332 = vld [vmem:[#allocation7 + $0x48] sm:$0xff]
        %v333 = vld [vmem:[#allocation7 + $0x50] sm:$0xff]
        %v334 = vld [vmem:[#allocation7 + $0x58] sm:$0xff]
        %v335 = vld [vmem:[#allocation7 + $0x60] sm:$0xff]
        %v336 = vld [vmem:[#allocation7 + $0x68] sm:$0xff]
        %v337 = vld [vmem:[#allocation7 + $0x70] sm:$0xff]
        %v338 = vld [vmem:[#allocation7 + $0x78] sm:$0xff]
        %v339 = vld [vmem:[%s4] sm:$0x1]
        %v341 = vperm.slane %v339, 0
        %343 = vmatpush.msra.mxu0 %v338
        %344 = vmatpush.msra.mxu0 %v337
        %345 = vmatpush.msra.mxu0 %v336
        %346 = vmatpush.msra.mxu0 %v335
        %347 = vmatpush.msra.mxu0 %v334
        %348 = vmatpush.msra.mxu0 %v333
        %349 = vmatpush.msra.mxu0 %v332
        %350 = vmatpush.msra.mxu0 %v331
        %351 = vmatpush.msra.mxu0 %v330
        %352 = vmatpush.msra.mxu0 %v329
        %353 = vmatpush.msra.mxu0 %v328
        %354 = vmatpush.msra.mxu0 %v327
        %355 = vmatpush.msra.mxu0 %v326
        %356 = vmatpush.msra.mxu0 %v325
        %357 = vmatpush.msra.mxu0 %v324
        %358 = vmatpush.msra.mxu0 %v323
        %359 = vmatmul.f32.gmra.mxu0 %v322
        %v360 = vpop.f32.mrf.mxu0
        %v361 = vadd.f32 %v341, %v360
        %362 = vdwg.mxu0
        %v363 = vadd.f32 %v361, %v275
        %vm364 = vcmask 261120
        %365 = vst.msk [vmem:[%s274] sm:$0xff] %vm364, %v363
        %s366 = sand.u32 %s141, 1
        %s367 = scalar_lea.sflag [#allocation4], %s366
        %s368 = sand.u32 %s141, 1
        %s369 = smul.addr %s368, 8
        %s370 = scalar_lea.vmem [#allocation8], %s369
        // Predicated region
        $region53: #{tpu_custom_call.1} parent=39 // pred_check
          %p371 = pneg %p151
        $region54: #{tpu_custom_call.1} parent=39 // pred_check_branch
          %373 = sbr.rel (%p371) target = $region56
        $region55: #{tpu_custom_call.1} parent=39 // pred_region
          %375 = vsyncadd %s367, 0
          %s376 = smul.addr %s23, 8
          %s377 = scalar_lea.hbm %s5, %s376
          %s379 = sshll.u32 %s370, 4
          %s380 = int_to_ptr.vmem [resolvable:$true] %s379
          %s381 = sshll.u32 %s377, 4
          %s382 = int_to_ptr.hbm [resolvable:$true] %s381
          %384 = dma.vmem_to_hbm [thread:$0]  %s380, 128, %s382, %s367
        $region56: #{tpu_custom_call.1} parent=39 // pred_fallthru
          _
      $region40: #{tpu_custom_call.1} parent=5 // pred_fallthru
        _
      %p385 = scmp.le.s32.totalorder 2, %s18
      // Predicated region
      $region57: #{tpu_custom_call.1} parent=5 // pred_check
        %p386 = pneg %p385
      $region58: #{tpu_custom_call.1} parent=5 // pred_check_branch
        %388 = sbr.rel (%p386) target = $region60
      $region59: #{tpu_custom_call.1} parent=5 // pred_region
        %s389 = ssub.s32 %s18, 2
        // Predicated region
        $region61: #{tpu_custom_call.1} parent=59 // pred_check
          %p390 = pneg %p157
        $region62: #{tpu_custom_call.1} parent=59 // pred_check_branch
          %392 = sbr.rel (%p390) target = $region64
        $region63: #{tpu_custom_call.1} parent=59 // pred_region
          %s393 = sand.u32 %s142, 1
          %s394 = scalar_lea.sflag [#allocation4], %s393
          %s395 = sand.u32 %s142, 1
          %s396 = smul.addr %s395, 8
          %s397 = scalar_lea.vmem [#allocation8], %s396
          %399 = dma.done %s394, 128
        $region64: #{tpu_custom_call.1} parent=59 // pred_fallthru
          _
      $region60: #{tpu_custom_call.1} parent=5 // pred_fallthru
        _
    $region6: #{tpu_custom_call.1} parent=1 // loop_footer
      %s22 = sadd.s32 1, %s18
    $region7: #{tpu_custom_call.1} parent=1 // loop_footer_branch
      %17 = sbr.rel target = $region3
    $region8: #{tpu_custom_call.1} parent=1 // loop_exit
      _
    %400 = vsyncpa [#allocation3], 1
    %s401 = scalar_lea.sflag [#allocation3], 1
    %402 = vsyncpa %s401, 1
    %403 = vsyncpa [#allocation6], 1
    %404 = vsyncpa [#allocation4], 1
    %s405 = scalar_lea.sflag [#allocation4], 1
    %406 = vsyncpa %s405, 1

</llo_original>
